<compile_context>
chip_gen: v7x
topology: tpu7x:2x2x1
jax: 0.10.0
libtpu: 0.0.40
codegen_flags: <defaults>
</compile_context>

<pallas_src>
import functools

import jax
import jax.numpy as jnp
from jax.experimental import pallas as pl
from jax.experimental.pallas import tpu as pltpu


# ---------------------------------------------------------------------------
# helpers
# ---------------------------------------------------------------------------
def _round_up(x: int, m: int) -> int:
    return (x + m - 1) // m * m


def _pick_seq_tile(n: int, target: int) -> int:
    """Largest tile <= target that divides n and is a multiple of 8, else n."""
    for t in (512, 384, 256, 128, 64, 32, 16, 8):
        if t <= target and t <= n and n % t == 0:
            return t
    return n


def _resident_spec(block_shape, index_map):
    """BlockSpec for grid-constant operands (weights/bias): single-buffered."""
    try:
        return pl.BlockSpec(block_shape, index_map, pipeline_mode=pl.Buffered(1))
    except TypeError:  # older/newer API without pipeline_mode kwarg
        return pl.BlockSpec(block_shape, index_map)


def _vmem_limit(nbytes: int) -> int:
    return int(min(max(nbytes, 32 * 1024 * 1024), 128 * 1024 * 1024))


# ---------------------------------------------------------------------------
# Kernel 1: fused QKV projection, outputs already split into q / k / v
# ---------------------------------------------------------------------------
def _qkv_linear_kernel(x_ref, w_ref, b_ref, q_ref, k_ref, v_ref, *, dim):
    # matmul in the model dtype, f32 accumulation on the MXU
    acc = jnp.dot(x_ref[...], w_ref[...], preferred_element_type=jnp.float32)
    acc = acc + b_ref[...].astype(jnp.float32)          # (1, 3C) broadcasts over rows
    acc = acc.astype(q_ref.dtype)                        # (tm, 3C)
    q_ref[...] = acc[:, 0 * dim:1 * dim]
    k_ref[...] = acc[:, 1 * dim:2 * dim]
    v_ref[...] = acc[:, 2 * dim:3 * dim]


def qkv_linear_pallas(x2d, w, b, *, tm_target=256):
    """x2d: (M, C), w: (C, 3C), b: (3C,) -> q, k, v each (M, C)."""
    M, K = x2d.shape
    K2, N3 = w.shape
    assert K == K2 and N3 % 3 == 0
    dim = N3 // 3

    tm = min(tm_target, _round_up(M, 8))
    Mp = _round_up(M, tm)
    if Mp != M:
        x2d = jnp.pad(x2d, ((0, Mp - M), (0, 0)))

    isz = jnp.dtype(x2d.dtype).itemsize
    wsz = jnp.dtype(w.dtype).itemsize
    vmem_est = ((K * N3 + N3) * wsz            # resident weight + bias (1 buffer)
                + 2 * tm * K * isz             # double-buffered activation tile
                + 2 * 3 * tm * dim * isz       # double-buffered outputs
                + tm * N3 * 4                  # f32 accumulator
                + (4 << 20))
    cost = pl.CostEstimate(
        flops=int(2 * Mp * K * N3),
        transcendentals=0,
        bytes_accessed=int((Mp * K + K * N3 + N3 + Mp * N3) * isz))

    out_spec = pl.BlockSpec((tm, dim), lambda i: (i, 0))
    q, k, v = pl.pallas_call(
        functools.partial(_qkv_linear_kernel, dim=dim),
        out_shape=tuple(jax.ShapeDtypeStruct((Mp, dim), x2d.dtype) for _ in range(3)),
        grid=(Mp // tm,),
        in_specs=[
            pl.BlockSpec((tm, K), lambda i: (i, 0)),            # activation tile
            _resident_spec((K, N3), lambda i: (0, 0)),          # full weight, 1 buffer
            _resident_spec((1, N3), lambda i: (0, 0)),          # bias row, 1 buffer
        ],
        out_specs=(out_spec, out_spec, out_spec),
        compiler_params=pltpu.CompilerParams(
            dimension_semantics=("parallel",),
            vmem_limit_bytes=_vmem_limit(vmem_est)),
        cost_estimate=cost,
    )(x2d, w, b.reshape(1, N3))

    if Mp != M:
        q, k, v = q[:M], k[:M], v[:M]
    return q, k, v


# ---------------------------------------------------------------------------
# Kernel 2: generic fused linear  y = x @ w + b   (output projection)
# ---------------------------------------------------------------------------
def _linear_kernel(x_ref, w_ref, b_ref, o_ref):
    acc = jnp.dot(x_ref[...], w_ref[...], preferred_element_type=jnp.float32)
    acc = acc + b_ref[...].astype(jnp.float32)
    o_ref[...] = acc.astype(o_ref.dtype)


def linear_pallas(x2d, w, b, *, tm_target=256):
    """x2d: (M, K), w: (K, Nout), b: (Nout,) -> (M, Nout)."""
    M, K = x2d.shape
    K2, Nout = w.shape
    assert K == K2

    tm = min(tm_target, _round_up(M, 8))
    Mp = _round_up(M, tm)
    if Mp != M:
        x2d = jnp.pad(x2d, ((0, Mp - M), (0, 0)))

    isz = jnp.dtype(x2d.dtype).itemsize
    wsz = jnp.dtype(w.dtype).itemsize
    vmem_est = ((K * Nout + Nout) * wsz
                + 2 * tm * K * isz
                + 2 * tm * Nout * isz
                + tm * Nout * 4
                + (4 << 20))
    cost = pl.CostEstimate(
        flops=int(2 * Mp * K * Nout),
        transcendentals=0,
        bytes_accessed=int((Mp * K + K * Nout + Nout + Mp * Nout) * isz))

    out = pl.pallas_call(
        _linear_kernel,
        out_shape=jax.ShapeDtypeStruct((Mp, Nout), x2d.dtype),
        grid=(Mp // tm,),
        in_specs=[
            pl.BlockSpec((tm, K), lambda i: (i, 0)),
            _resident_spec((K, Nout), lambda i: (0, 0)),
            _resident_spec((1, Nout), lambda i: (0, 0)),
        ],
        out_specs=pl.BlockSpec((tm, Nout), lambda i: (i, 0)),
        compiler_params=pltpu.CompilerParams(
            dimension_semantics=("parallel",),
            vmem_limit_bytes=_vmem_limit(vmem_est)),
        cost_estimate=cost,
    )(x2d, w, b.reshape(1, Nout))
    return out[:M] if Mp != M else out


# ---------------------------------------------------------------------------
# Kernel 3: attention core on the merged (N, C) layout.
# Heads are lane slices [h*hd : (h+1)*hd]; output is written already merged.
# ---------------------------------------------------------------------------
def _attn_kernel(q_ref, k_ref, v_ref, o_ref, *, num_heads, head_dim, scale):
    q = q_ref[...]                                      # (tq, C)  model dtype
    k = k_ref[...]                                      # (N,  C)
    v = v_ref[...]                                      # (N,  C)
    outs = []
    for h in range(num_heads):                          # static unroll over heads
        lo, hi = h * head_dim, (h + 1) * head_dim
        q_h = q[:, lo:hi] * scale                       # scale in model dtype (as torch)
        # s = q_h @ k_h^T   (contract head dim of both), f32 accumulation
        s = jax.lax.dot_general(q_h, k[:, lo:hi], (((1,), (1,)), ((), ())),
                                preferred_element_type=jnp.float32)   # (tq, N)
        s = s - jnp.max(s, axis=-1, keepdims=True)
        p = jnp.exp(s)                                  # unnormalized probs (f32)
        l = jnp.sum(p, axis=-1, keepdims=True)          # (tq, 1) row sums
        # deferred normalization: matmul first, then scale the small output
        o_h = jnp.dot(p.astype(v.dtype), v[:, lo:hi],
                      preferred_element_type=jnp.float32)             # (tq, hd)
        o_h = o_h * pl.reciprocal(l)
        outs.append(o_h)
    # TODO(synk): attn_drop > 0 (training mode) not implemented (identity here).
    o_ref[...] = jnp.concatenate(outs, axis=-1).astype(o_ref.dtype)   # (tq, C) lane-dense


def attention_core_pallas(q, k, v, *, num_heads, scale, tq_target=256):
    """q, k, v: (B, N, C) merged layout -> (B, N, C) merged layout."""
    B, N, C = q.shape
    assert C % num_heads == 0
    hd = C // num_heads
    tq = _pick_seq_tile(N, tq_target)
    nq = N // tq

    isz = jnp.dtype(q.dtype).itemsize
    vmem_est = (2 * tq * C * isz               # q tile (double-buffered)
                + 2 * 2 * N * C * isz          # k, v full-seq blocks
                + 2 * tq * C * isz             # output tile
                + 2 * tq * N * 4               # f32 score + prob tiles
                + (4 << 20))
    cost = pl.CostEstimate(
        flops=int(4 * B * N * N * C),
        transcendentals=int(B * num_heads * N * N),
        bytes_accessed=int(4 * B * N * C * isz))

    kern = functools.partial(_attn_kernel, num_heads=num_heads,
                             head_dim=hd, scale=scale)
    return pl.pallas_call(
        kern,
        out_shape=jax.ShapeDtypeStruct((B, N, C), q.dtype),
        grid=(B, nq),
        in_specs=[
            pl.BlockSpec((None, tq, C), lambda b, i: (b, i, 0)),   # q row tile
            pl.BlockSpec((None, N, C), lambda b, i: (b, 0, 0)),    # full K per batch
            pl.BlockSpec((None, N, C), lambda b, i: (b, 0, 0)),    # full V per batch
        ],
        out_specs=pl.BlockSpec((None, tq, C), lambda b, i: (b, i, 0)),
        compiler_params=pltpu.CompilerParams(
            dimension_semantics=("parallel", "parallel"),
            vmem_limit_bytes=_vmem_limit(vmem_est)),
        cost_estimate=cost,
    )(q, k, v)


# ---------------------------------------------------------------------------
# Module wrapper matching promptda.attention.Attention (pe='normal' path)
# ---------------------------------------------------------------------------
class AttentionPallas:
    def __init__(self, dim, num_heads=8, qkv_bias=False, proj_bias=True,
                 attn_drop=0.0, proj_drop=0.0, pe='normal', *,
                 key=None, dtype=jnp.float32):
        assert dim % num_heads == 0
        self.dim = dim
        self.num_heads = num_heads
        self.head_dim = dim // num_heads
        self.scale = self.head_dim ** (-0.5)
        self.pe = pe
        # TODO(synk): pe == 'qk' branch (LayerNorm on q + x_pe / k + x_pe) not implemented;
        #             only the default 'normal' / 'apply' paths are supported.
        # TODO(synk): attn_drop / proj_drop > 0 in training mode not implemented
        #             (defaults are 0.0 -> identity, matching eval-mode forward).

        if key is None:
            key = jax.random.PRNGKey(0)
        k1, k2, k3, k4 = jax.random.split(key, 4)
        lim = (1.0 / dim) ** 0.5
        # Weights stored (in, out) so kernels compute x @ w + b directly
        # (equivalent to PyTorch's x @ W^T + b with W of shape (out, in)).
        self.w_qkv = jax.random.uniform(k1, (dim, 3 * dim), dtype, -lim, lim)
        self.b_qkv = (jax.random.uniform(k2, (3 * dim,), dtype, -lim, lim)
                      if qkv_bias else jnp.zeros((3 * dim,), dtype))
        self.w_proj = jax.random.uniform(k3, (dim, dim), dtype, -lim, lim)
        self.b_proj = (jax.random.uniform(k4, (dim,), dtype, -lim, lim)
                       if proj_bias else jnp.zeros((dim,), dtype))

    def __call__(self, x, x_pe=None):
        B, N, C = x.shape
        x2d = x.reshape(B * N, C)

        # QKV projection -> already split q/k/v in merged-head (M, C) layout
        q2d, k2d, v2d = qkv_linear_pallas(x2d, self.w_qkv, self.b_qkv)
        q = q2d.reshape(B, N, C)       # free reshapes; no HBM transposes
        k = k2d.reshape(B, N, C)
        v = v2d.reshape(B, N, C)

        # Scaled-dot-product attention; heads handled as lane slices in-kernel,
        # output written straight back in merged (B, N, C) layout.
        o = attention_core_pallas(q, k, v, num_heads=self.num_heads, scale=self.scale)

        # Output projection
        out = linear_pallas(o.reshape(B * N, C), self.w_proj, self.b_proj)
        return out.reshape(B, N, C)


# ---------------------------------------------------------------------------
# Pure-JAX reference (mirrors the PyTorch forward) for correctness checking
# ---------------------------------------------------------------------------
def attention_reference(x, mod: AttentionPallas):
    B, N, C = x.shape
    H, hd = mod.num_heads, mod.head_dim
    qkv = x.reshape(B * N, C) @ mod.w_qkv + mod.b_qkv
    qkv = qkv.reshape(B, N, 3, H, hd).transpose(2, 0, 3, 1, 4)
    q, k, v = qkv[0] * mod.scale, qkv[1], qkv[2]
    attn = jnp.einsum('bhnd,bhmd->bhnm', q, k)
    attn = jax.nn.softmax(attn, axis=-1)
    o = jnp.einsum('bhnm,bhmd->bhnd', attn, v)
    o = o.transpose(0, 2, 1, 3).reshape(B * N, C)
    out = o @ mod.w_proj + mod.b_proj
    return out.reshape(B, N, C)


if __name__ == "__main__":
    key = jax.random.PRNGKey(0)
    xk, wk = jax.random.split(key)

    B, N, C, H = 2, 8, 32, 4          # batch=2, seq=8, hidden=32, 4 heads (head_dim=8)
    x = jax.random.normal(xk, (B, N, C), dtype=jnp.float32)

    mod = AttentionPallas(dim=C, num_heads=H, qkv_bias=False, proj_bias=True, key=wk)

    y = jax.block_until_ready(mod(x))
    assert y.shape == (B, N, C) and y.dtype == x.dtype

    y_ref = jax.block_until_ready(attention_reference(x, mod))
    max_err = float(jnp.max(jnp.abs(y - y_ref)))
    assert jnp.allclose(y, y_ref, rtol=1e-4, atol=1e-4), f"max_err={max_err}"

    print("KERNEL_OK")
</pallas_src>

<mosaic_0001>
module attributes {stable_mosaic.version = 11 : i64} {
  func.func @_qkv_linear_kernel(%arg0: i32, %arg1: memref<16x32xf32, #tpu.memory_space<vmem>>, %arg2: memref<32x96xf32, #tpu.memory_space<vmem>>, %arg3: memref<1x96xf32, #tpu.memory_space<vmem>>, %arg4: memref<16x32xf32, #tpu.memory_space<vmem>>, %arg5: memref<16x32xf32, #tpu.memory_space<vmem>>, %arg6: memref<16x32xf32, #tpu.memory_space<vmem>>) attributes {dimension_semantics = [#tpu.dimension_semantics<parallel>], iteration_bounds = array<i64: 1>, scalar_prefetch = 0 : i64, scratch_operands = 0 : i64, tpu.core_type = #tpu.core_type<tc>, window_params = [{transform_indices = @transform_0, window_bounds = array<i64: 16, 32>}, {pipeline_mode = #tpu.pipeline_mode<synchronous>, transform_indices = @transform_1, window_bounds = array<i64: 32, 96>}, {pipeline_mode = #tpu.pipeline_mode<synchronous>, transform_indices = @transform_2, window_bounds = array<i64: 1, 96>}, {transform_indices = @transform_3, window_bounds = array<i64: 16, 32>}, {transform_indices = @transform_4, window_bounds = array<i64: 16, 32>}, {transform_indices = @transform_5, window_bounds = array<i64: 16, 32>}]} {
    %c0 = arith.constant 0 : index
    %c0_0 = arith.constant 0 : index
    %0 = vector.load %arg1[%c0, %c0_0] : memref<16x32xf32, #tpu.memory_space<vmem>>, vector<16x32xf32>
    %c0_1 = arith.constant 0 : index
    %c0_2 = arith.constant 0 : index
    %1 = vector.load %arg2[%c0_1, %c0_2] : memref<32x96xf32, #tpu.memory_space<vmem>>, vector<32x96xf32>
    %cst = arith.constant dense<0.000000e+00> : vector<16x96xf32>
    %2 = tpu.matmul %0, %1, %cst {dimension_numbers = #tpu.dot_dimension_numbers<[1], [0], [0], [1], [0, 0, 1, 1], [], []>} : vector<16x32xf32>, vector<32x96xf32>, vector<16x96xf32> -> vector<16x96xf32>
    %c0_3 = arith.constant 0 : index
    %c0_4 = arith.constant 0 : index
    %3 = vector.load %arg3[%c0_3, %c0_4] : memref<1x96xf32, #tpu.memory_space<vmem>>, vector<1x96xf32>
    %4 = vector.broadcast %3 : vector<1x96xf32> to vector<16x96xf32>
    %5 = arith.addf %2, %4 : vector<16x96xf32>
    %6 = vector.extract_strided_slice %5 {offsets = [0, 0], sizes = [16, 32], strides = [1, 1]} : vector<16x96xf32> to vector<16x32xf32>
    %c0_5 = arith.constant 0 : index
    %c0_6 = arith.constant 0 : index
    %7 = vector.load %arg4[%c0_5, %c0_6] : memref<16x32xf32, #tpu.memory_space<vmem>>, vector<16x32xf32>
    tpu.vector_store %arg4[%c0_5, %c0_6], %6 {strides = array<i32>} : memref<16x32xf32, #tpu.memory_space<vmem>>, vector<16x32xf32>,
    %8 = vector.extract_strided_slice %5 {offsets = [0, 32], sizes = [16, 32], strides = [1, 1]} : vector<16x96xf32> to vector<16x32xf32>
    %c0_7 = arith.constant 0 : index
    %c0_8 = arith.constant 0 : index
    %9 = vector.load %arg5[%c0_7, %c0_8] : memref<16x32xf32, #tpu.memory_space<vmem>>, vector<16x32xf32>
    tpu.vector_store %arg5[%c0_7, %c0_8], %8 {strides = array<i32>} : memref<16x32xf32, #tpu.memory_space<vmem>>, vector<16x32xf32>,
    %10 = vector.extract_strided_slice %5 {offsets = [0, 64], sizes = [16, 32], strides = [1, 1]} : vector<16x96xf32> to vector<16x32xf32>
    %c0_9 = arith.constant 0 : index
    %c0_10 = arith.constant 0 : index
    %11 = vector.load %arg6[%c0_9, %c0_10] : memref<16x32xf32, #tpu.memory_space<vmem>>, vector<16x32xf32>
    tpu.vector_store %arg6[%c0_9, %c0_10], %10 {strides = array<i32>} : memref<16x32xf32, #tpu.memory_space<vmem>>, vector<16x32xf32>,
    return
  }
  func.func @transform_0(%arg0: i32) -> (i32, i32) {
    %c0_i32 = arith.constant 0 : i32
    %c0_i32_0 = arith.constant 0 : i32
    return %arg0, %c0_i32 : i32, i32
  }
  func.func @transform_1(%arg0: i32) -> (i32, i32) {
    %c0_i32 = arith.constant 0 : i32
    %c0_i32_0 = arith.constant 0 : i32
    %c0_i32_1 = arith.constant 0 : i32
    return %c0_i32, %c0_i32_0 : i32, i32
  }
  func.func @transform_2(%arg0: i32) -> (i32, i32) {
    %c0_i32 = arith.constant 0 : i32
    %c0_i32_0 = arith.constant 0 : i32
    %c0_i32_1 = arith.constant 0 : i32
    return %c0_i32, %c0_i32_0 : i32, i32
  }
  func.func @transform_3(%arg0: i32) -> (i32, i32) {
    %c0_i32 = arith.constant 0 : i32
    %c0_i32_0 = arith.constant 0 : i32
    return %arg0, %c0_i32 : i32, i32
  }
  func.func @transform_4(%arg0: i32) -> (i32, i32) {
    %c0_i32 = arith.constant 0 : i32
    %c0_i32_0 = arith.constant 0 : i32
    return %arg0, %c0_i32 : i32, i32
  }
  func.func @transform_5(%arg0: i32) -> (i32, i32) {
    %c0_i32 = arith.constant 0 : i32
    %c0_i32_0 = arith.constant 0 : i32
    return %arg0, %c0_i32 : i32, i32
  }
}

</mosaic_0001>

<llo_original>
// kernel: tpu_custom_call.1
$region0: #{tpu_custom_call.1}
  #allocation0 [shape = 'u32[]', space=smem, size = 0x4, offset = 0x4, fixed_abs, tag = 'smem constant byte address 0x4 - core index']
  #allocation1 [shape = 'u32[144,128]{1,0:T(1,128)}', space=vmem, size = 0x12000, scoped, tag = 'internal scratch']
  %s0 = inlined_call_operand.hbm [shape: f32[16,32], index: 0, kind: input, shape index: {}]
  %s1 = inlined_call_operand.hbm [shape: f32[32,96], index: 1, kind: input, shape index: {}]
  %s2 = inlined_call_operand.vmem [shape: f32[1,96], index: 2, kind: input, shape index: {}]
  %s3 = inlined_call_operand.hbm [shape: f32[16,32], index: 3, kind: output, shape index: {0}]
  %s4 = inlined_call_operand.hbm [shape: f32[16,32], index: 4, kind: output, shape index: {1}]
  %s5 = inlined_call_operand.hbm [shape: f32[16,32], index: 5, kind: output, shape index: {2}]
  %6 = xla_tuple %s3, %s4, %s5
  %s7 = sld [smem:[#allocation0]]
  $region46: #{tpu_custom_call.1} parent=0
    _
  %s9 = ssub.s32 1, %s7
  %s10 = scalar_select 0, %s9, %s7
  $region1: #{tpu_custom_call.1} parent=0
    #allocation2 [shape = 'u8[8192]{0}', space=vmem, size = 0x2000, scoped, tag = 'input window, operand 0, single buffered']
    #allocation3 [shape = 's32[1]{0}', space=sflag, size = 0x4, scoped, tag = 'scoped memory for tpu_custom_call.1']
    #allocation4 [shape = 's32[1]{0}', space=sflag, size = 0x4, scoped, tag = 'scoped memory for tpu_custom_call.1']
    #allocation5 [shape = 'u8[16384]{0}', space=vmem, size = 0x4000, scoped, tag = 'input window, operand 1, single buffered']
    #allocation6 [shape = 's32[1]{0}', space=sflag, size = 0x4, scoped, tag = 'scoped memory for tpu_custom_call.1']
    #allocation7 [shape = 'u8[8192]{0}', space=vmem, size = 0x2000, scoped, tag = 'output window, operand 0, single buffered']
    #allocation8 [shape = 'u8[8192]{0}', space=vmem, size = 0x2000, scoped, tag = 'output window, operand 1, single buffered']
    #allocation9 [shape = 's32[1]{0}', space=sflag, size = 0x4, scoped, tag = 'scoped memory for tpu_custom_call.1']
    #allocation10 [shape = 'u8[8192]{0}', space=vmem, size = 0x2000, scoped, tag = 'output window, operand 2, single buffered']
    %11 = vsyncpa [#allocation3], 0
    %12 = vsyncpa [#allocation6], 0
    %13 = vsyncpa [#allocation4], 0
    %14 = vsyncpa [#allocation9], 0
    // Predicated region
    $region2: #{tpu_custom_call.1} parent=1 // pred_check
      _
    $region3: #{tpu_custom_call.1} parent=1 // pred_check_branch
      %16 = sbr.rel (0) target = $region5
    $region4: #{tpu_custom_call.1} parent=1 // pred_region
      %s18 = ssub.s32 256, 256
      %19 = vsyncadd [#allocation3], %s18
      %s20 = sshll.u32 [#allocation2], 4
      %s21 = int_to_ptr.vmem [resolvable:$true] %s20
      %26 = dma.hbm_to_vmem [thread:$0]  %s0, 256, %s21, [#allocation3], 128, 128, 8
    $region5: #{tpu_custom_call.1} parent=1 // pred_fallthru
      _
    // Predicated region
    $region6: #{tpu_custom_call.1} parent=1 // pred_check
      _
    $region7: #{tpu_custom_call.1} parent=1 // pred_check_branch
      %28 = sbr.rel (0) target = $region9
    $region8: #{tpu_custom_call.1} parent=1 // pred_region
      %s30 = ssub.s32 512, 512
      %31 = vsyncadd [#allocation6], %s30
      %s32 = sshll.u32 [#allocation5], 4
      %s33 = int_to_ptr.vmem [resolvable:$true] %s32
      %38 = dma.hbm_to_vmem [thread:$0]  %s1, 512, %s33, [#allocation6], 128, 128, 8
    $region9: #{tpu_custom_call.1} parent=1 // pred_fallthru
      _
    // Predicated region
    $region10: #{tpu_custom_call.1} parent=1 // pred_check
      _
    $region11: #{tpu_custom_call.1} parent=1 // pred_check_branch
      %40 = sbr.rel (0) target = $region13
    $region12: #{tpu_custom_call.1} parent=1 // pred_region
      _
    $region13: #{tpu_custom_call.1} parent=1 // pred_fallthru
      _
    // Predicated region
    $region14: #{tpu_custom_call.1} parent=1 // pred_check
      _
    $region15: #{tpu_custom_call.1} parent=1 // pred_check_branch
      %42 = sbr.rel (0) target = $region17
    $region16: #{tpu_custom_call.1} parent=1 // pred_region
      %43 = dma.done [#allocation3], 256
    $region17: #{tpu_custom_call.1} parent=1 // pred_fallthru
      _
    // Predicated region
    $region18: #{tpu_custom_call.1} parent=1 // pred_check
      _
    $region19: #{tpu_custom_call.1} parent=1 // pred_check_branch
      %45 = sbr.rel (0) target = $region21
    $region20: #{tpu_custom_call.1} parent=1 // pred_region
      %46 = dma.done [#allocation6], 512
    $region21: #{tpu_custom_call.1} parent=1 // pred_fallthru
      _
    %v47 = vld [vmem:[#allocation2] sm:$0xff]
    %v48 = vld [vmem:[#allocation2 + $0x8] sm:$0xff]
    %v49 = vld [vmem:[#allocation5] sm:$0xff]
    %v50 = vld [vmem:[#allocation5 + $0x8] sm:$0xff]
    %v51 = vld [vmem:[#allocation5 + $0x10] sm:$0xff]
    %v52 = vld [vmem:[#allocation5 + $0x18] sm:$0xff]
    %v53 = vld [vmem:[%s2] sm:$0x1]
    %v55 = vlaneseq
    %v56 = vshrl.u32 %v55, 7
    %v57 = vsub.s32 0, %v56
    %v58 = vrot.slane %v53, %v57
    %vm60 = vcmask 261120
    %v62 = vsel %vm60, %v47, 0
    %v65 = vsel %vm60, %v48, 0
    %67 = vmatprep.subr.mxu0 0.0
    %68 = vmatpush1.msra.mxu0 %v49
    %69 = vmatprep.subr.mxu0 0.0
    %70 = vmatpush1.msra.mxu0 %v50
    %71 = vmatprep.subr.mxu0 0.0
    %72 = vmatpush1.msra.mxu0 %v51
    %73 = vmatprep.subr.mxu0 0.0
    %74 = vmatpush1.msra.mxu0 %v52
    %75 = vmatprep.subr.mxu0 0.0
    %76 = vmatpush1.msra.mxu0 0.0
    %77 = vmatprep.subr.mxu0 0.0
    %78 = vmatpush1.msra.mxu0 0.0
    %79 = vmatprep.subr.mxu0 0.0
    %80 = vmatpush1.msra.mxu0 0.0
    %81 = vmatprep.subr.mxu0 0.0
    %82 = vmatpush1.msra.mxu0 0.0
    %83 = vmatprep.subr.mxu0 0.0
    %84 = vmatpush1.msra.mxu0 0.0
    %85 = vmatprep.subr.mxu0 0.0
    %86 = vmatpush1.msra.mxu0 0.0
    %87 = vmatprep.subr.mxu0 0.0
    %88 = vmatpush1.msra.mxu0 0.0
    %89 = vmatprep.subr.mxu0 0.0
    %90 = vmatpush1.msra.mxu0 0.0
    %91 = vmatprep.subr.mxu0 0.0
    %92 = vmatpush1.msra.mxu0 0.0
    %93 = vmatprep.subr.mxu0 0.0
    %94 = vmatpush1.msra.mxu0 0.0
    %95 = vmatprep.subr.mxu0 0.0
    %96 = vmatpush1.msra.mxu0 0.0
    %97 = vmatprep.subr.mxu0 0.0
    %98 = vmatpush1.msra.mxu0 0.0
    %99 = vmatprep.subr.mxu0 0.0
    %100 = vmatpush1.msra.mxu0 0.0
    %101 = vmatprep.subr.mxu0 0.0
    %102 = vmatpush1.msra.mxu0 0.0
    %103 = vmatprep.subr.mxu0 0.0
    %104 = vmatpush1.msra.mxu0 0.0
    %105 = vmatprep.subr.mxu0 0.0
    %106 = vmatpush1.msra.mxu0 0.0
    %107 = vmatprep.subr.mxu0 0.0
    %108 = vmatpush1.msra.mxu0 0.0
    %109 = vmatprep.subr.mxu0 0.0
    %110 = vmatpush1.msra.mxu0 0.0
    %111 = vmatprep.subr.mxu0 0.0
    %112 = vmatpush1.msra.mxu0 0.0
    %113 = vmatprep.subr.mxu0 0.0
    %114 = vmatpush1.msra.mxu0 0.0
    %115 = vmatprep.subr.mxu0 0.0
    %116 = vmatpush1.msra.mxu0 0.0
    %117 = vmatprep.subr.mxu0 0.0
    %118 = vmatpush1.msra.mxu0 0.0
    %119 = vmatprep.subr.mxu0 0.0
    %120 = vmatpush1.msra.mxu0 0.0
    %121 = vmatprep.subr.mxu0 0.0
    %122 = vmatpush1.msra.mxu0 0.0
    %123 = vmatprep.subr.mxu0 0.0
    %124 = vmatpush1.msra.mxu0 0.0
    %125 = vmatprep.subr.mxu0 0.0
    %126 = vmatpush1.msra.mxu0 0.0
    %127 = vmatprep.subr.mxu0 0.0
    %128 = vmatpush1.msra.mxu0 0.0
    %129 = vmatprep.subr.mxu0 0.0
    %130 = vmatpush1.msra.mxu0 0.0
    %131 = vmatprep.mubr.f32.mxu0 0.0
    %132 = vmatmul.mubr.f32.gmra.mrb[0].mxu0 %v62
    %v133 = vpop.f32.mrb[0].mxu0
    %v134 = vadd.f32 %v58, %v133
    %v135 = vpop.f32.mrb[0].mxu0
    %136 = vmatprep.mubr.f32.mxu0 0.0
    %137 = vmatmul.mubr.f32.gmra.mrb[0].mxu0 %v65
    %v138 = vpop.f32.mrb[0].mxu0
    %v139 = vadd.f32 %v58, %v138
    %v140 = vpop.f32.mrb[0].mxu0
    %141 = vdwg.mxu0
    %142 = vst.msk [vmem:[#allocation7] sm:$0xff] %vm60, %v134
    %143 = vst.msk [vmem:[#allocation7 + $0x8] sm:$0xff] %vm60, %v139
    %146 = vrot.lane.b32.xlu0 %v134, 96
    %v147 = vpop.permute.xlu0 %146
    %148 = vrot.lane.b32.xlu0 %v139, 96
    %v149 = vpop.permute.xlu0 %148
    %152 = vst.msk [vmem:[#allocation8] sm:$0xff] %vm60, %v147
    %153 = vst.msk [vmem:[#allocation8 + $0x8] sm:$0xff] %vm60, %v149
    %154 = vrot.lane.b32.xlu0 %v134, 64
    %v155 = vpop.permute.xlu0 %154
    %156 = vrot.lane.b32.xlu0 %v139, 64
    %v157 = vpop.permute.xlu0 %156
    %160 = vst.msk [vmem:[#allocation10] sm:$0xff] %vm60, %v155
    %161 = vst.msk [vmem:[#allocation10 + $0x8] sm:$0xff] %vm60, %v157
    // Predicated region
    $region22: #{tpu_custom_call.1} parent=1 // pred_check
      _
    $region23: #{tpu_custom_call.1} parent=1 // pred_check_branch
      %163 = sbr.rel (0) target = $region25
    $region24: #{tpu_custom_call.1} parent=1 // pred_region
      %s165 = ssub.s32 256, 256
      %166 = vsyncadd [#allocation4], %s165
      %s167 = sshll.u32 [#allocation7], 4
      %s168 = int_to_ptr.vmem [resolvable:$true] %s167
      %173 = dma.vmem_to_hbm [thread:$0]  %s168, 256, %s3, [#allocation4], 128, 128, 8
    $region25: #{tpu_custom_call.1} parent=1 // pred_fallthru
      _
    // Predicated region
    $region26: #{tpu_custom_call.1} parent=1 // pred_check
      _
    $region27: #{tpu_custom_call.1} parent=1 // pred_check_branch
      %175 = sbr.rel (0) target = $region29
    $region28: #{tpu_custom_call.1} parent=1 // pred_region
      %s177 = ssub.s32 256, 256
      %178 = vsyncadd [#allocation9], %s177
      %s179 = sshll.u32 [#allocation8], 4
      %s180 = int_to_ptr.vmem [resolvable:$true] %s179
      %185 = dma.vmem_to_hbm [thread:$0]  %s180, 256, %s4, [#allocation9], 128, 128, 8
    $region29: #{tpu_custom_call.1} parent=1 // pred_fallthru
      _
    // Predicated region
    $region30: #{tpu_custom_call.1} parent=1 // pred_check
      _
    $region31: #{tpu_custom_call.1} parent=1 // pred_check_branch
      %187 = sbr.rel (0) target = $region33
    $region32: #{tpu_custom_call.1} parent=1 // pred_region
      %s189 = ssub.s32 256, 256
      %190 = vsyncadd [#allocation9], %s189
      %s191 = sshll.u32 [#allocation10], 4
      %s192 = int_to_ptr.vmem [resolvable:$true] %s191
      %197 = dma.vmem_to_hbm [thread:$0]  %s192, 256, %s5, [#allocation9], 128, 128, 8
    $region33: #{tpu_custom_call.1} parent=1 // pred_fallthru
      _
    // Predicated region
    $region34: #{tpu_custom_call.1} parent=1 // pred_check
      _
    $region35: #{tpu_custom_call.1} parent=1 // pred_check_branch
      %199 = sbr.rel (0) target = $region37
    $region36: #{tpu_custom_call.1} parent=1 // pred_region
      %200 = dma.done [#allocation4], 256
    $region37: #{tpu_custom_call.1} parent=1 // pred_fallthru
      _
    // Predicated region
    $region38: #{tpu_custom_call.1} parent=1 // pred_check
      _
    $region39: #{tpu_custom_call.1} parent=1 // pred_check_branch
      %202 = sbr.rel (0) target = $region41
    $region40: #{tpu_custom_call.1} parent=1 // pred_region
      %203 = dma.done [#allocation9], 256
    $region41: #{tpu_custom_call.1} parent=1 // pred_fallthru
      _
    // Predicated region
    $region42: #{tpu_custom_call.1} parent=1 // pred_check
      _
    $region43: #{tpu_custom_call.1} parent=1 // pred_check_branch
      %205 = sbr.rel (0) target = $region45
    $region44: #{tpu_custom_call.1} parent=1 // pred_region
      %206 = dma.done [#allocation9], 256
    $region45: #{tpu_custom_call.1} parent=1 // pred_fallthru
      _
    %207 = vsyncpa [#allocation3], 1
    %208 = vsyncpa [#allocation6], 1
    %209 = vsyncpa [#allocation4], 1
    %210 = vsyncpa [#allocation9], 1

</llo_original>
